<compile_context>
chip_gen: v6e
topology: v6e:2x2x1
jax: 0.10.0
libtpu: 0.0.40
codegen_flags: <defaults>
</compile_context>

<pallas_src>
import jax
import jax.numpy as jnp
from jax.experimental import pallas as pl
from jax.experimental.pallas import tpu as pltpu


def _round_up(a, m):
    return (a + m - 1) // m * m


def _assoc_score_kernel(v_ref, at_ref, dinv_ref, b_ref, out_ref, acc_ref):
    # Grid = (lane blocks i [parallel], contraction blocks k [arbitrary, innermost]).
    k = pl.program_id(1)

    @pl.when(k == 0)
    def _init():
        acc_ref[...] = jnp.zeros_like(acc_ref)

    bk = at_ref.shape[0]                       # static tile extent (contraction)
    kk = pl.multiple_of(k * bk, 128)

    # Resident hi/lo bf16 vector -> (2, bk) slice along the contraction axis.
    v_blk = v_ref[:, pl.ds(kk, bk)]

    # int8 adjacency tile -> bf16 on the VPU (exact for small integer counts), then a
    # native bf16 x bf16 -> f32 MXU matvec; hi and lo rows reuse the same tile.
    at_bf16 = at_ref[...].astype(jnp.bfloat16)
    acc_ref[...] += jnp.dot(v_blk, at_bf16, preferred_element_type=jnp.float32)

    @pl.when(k == pl.num_programs(1) - 1)
    def _finalize():
        # Recombine hi/lo partials, apply row normalization dinv_i, folded bias, sigmoid.
        logits = (acc_ref[0:1, :] + acc_ref[1:2, :]) * dinv_ref[...] + b_ref[0, 0]
        out_ref[...] = jax.nn.sigmoid(logits)


def precompute_graph(edge_index, n, n_pad_k, n_pad_n):
    """Dense TRANSPOSED adjacency (int8, with self loops) + D^{-1/2}.

    at[j, i] = #edges j -> i  (PyG GCNConv aggregates A_hat[target, source]).
    For a static graph this O(N^2) build is the expensive wrapper step -- compute it once
    and pass it back to association_score(..., graph=(at, dinv)) to amortize it.
    int8 is exact while per-(i, j) edge multiplicity stays <= 127.
    """
    src = edge_index[0]
    dst = edge_index[1]
    loop = jnp.arange(n, dtype=edge_index.dtype)
    src = jnp.concatenate([src, loop])
    dst = jnp.concatenate([dst, loop])

    at = jnp.zeros((n_pad_k, n_pad_n), jnp.int8).at[src, dst].add(1)

    deg = jnp.zeros((n,), jnp.float32).at[dst].add(1.0)       # O(E) segment sum
    dinv = jnp.where(deg > 0, 1.0 / jnp.sqrt(deg), 0.0)        # D^{-1/2}
    return at, dinv


def association_score(x, edge_index, w_gcn, b_gcn, w_mlp, b_mlp, *,
                      block_k=1024, block_n=2048, graph=None):
    """x: [N, in_dim] float32, edge_index: [2, E] int32 (row 0 = source, row 1 = target)."""
    n = x.shape[0]
    n128 = _round_up(n, 128)

    # Tiles: forced multiples of 128, clamped to the (128-padded) problem size.
    bk = min(max(128, _round_up(int(block_k), 128)), n128)
    bn = min(max(128, _round_up(int(block_n), 128)), n128)
    # v7x shards the "parallel" (lane) axis across its two TensorCores: keep >= 2 blocks
    # when possible (prefer shrinking TN rather than idling a core).
    if n128 // bn < 2 and bn > 128:
        bn = max(128, _round_up(pl.cdiv(n128, 2), 128))
    n_pad_k = _round_up(n, bk)
    n_pad_n = _round_up(n, bn)

    if graph is None:
        graph = precompute_graph(edge_index, n, n_pad_k, n_pad_n)
    at, dinv = graph

    # --- plain-JAX glue: fold the Linear(hidden, 1) head into the GCN weight ----------
    w_comb = jnp.dot(w_gcn.astype(jnp.float32), w_mlp.astype(jnp.float32))      # [in_dim, 1]
    b_comb = (jnp.dot(b_gcn.astype(jnp.float32), w_mlp.astype(jnp.float32))
              + b_mlp.astype(jnp.float32))                                      # [1]
    xv = jnp.dot(x.astype(jnp.float32), w_comb)[:, 0]                           # [n]

    # Column scale dinv[j] folded into the tiny resident vector; hi/lo bf16 split keeps
    # the kernel on the native bf16 MXU path without losing f32-level accuracy.
    v_full = xv * dinv
    v_hi = v_full.astype(jnp.bfloat16)
    v_lo = (v_full - v_hi.astype(jnp.float32)).astype(jnp.bfloat16)
    v = jnp.zeros((2, n_pad_k), jnp.bfloat16)
    v = v.at[0, :n].set(v_hi).at[1, :n].set(v_lo)

    dinv_row = jnp.zeros((1, n_pad_n), jnp.float32).at[0, :n].set(dinv)
    b_comb = b_comb.reshape(1, 1)

    # --- Pallas kernel -----------------------------------------------------------------
    grid = (n_pad_n // bn, n_pad_k // bk)

    # VMEM budget derived from the actual working set (+ headroom): safe on v7x's 64 MiB.
    vmem_bytes = (2 * bk * bn                  # AT int8 tile, double-buffered
                  + 2 * (2 * n_pad_k * 2)      # resident v (hi/lo bf16)
                  + 2 * 2 * bn * 4             # dinv row + out block, double-buffered
                  + 2 * bn * 4)                # f32 accumulator scratch
    vmem_limit = int(min(max(vmem_bytes + (6 << 20), 16 << 20), 64 << 20))

    out = pl.pallas_call(
        _assoc_score_kernel,
        out_shape=jax.ShapeDtypeStruct((1, n_pad_n), jnp.float32),
        grid_spec=pltpu.PrefetchScalarGridSpec(
            num_scalar_prefetch=0,
            grid=grid,
            in_specs=[
                # v hi/lo: fully resident (constant index_map -> DMA'd once).
                pl.BlockSpec((2, n_pad_k), lambda i, k: (0, 0)),
                # AT: (bk, bn) int8 streamed tile (the only large HBM operand).
                pl.BlockSpec((bk, bn), lambda i, k: (k, i)),
                # dinv row-scale: (1, bn) slice along the output lane axis.
                pl.BlockSpec((1, bn), lambda i, k: (0, i)),
                # Folded bias: a single scalar kept in SMEM.
                pl.BlockSpec((1, 1), lambda i, k: (0, 0),
                             memory_space=pltpu.MemorySpace.SMEM),
            ],
            # Lane-dense output slab; same block across k -> resident until finalize.
            out_specs=pl.BlockSpec((1, bn), lambda i, k: (0, i)),
            scratch_shapes=[pltpu.VMEM((2, bn), jnp.float32)],   # hi/lo f32 accumulators
        ),
        compiler_params=pltpu.CompilerParams(
            dimension_semantics=("parallel", "arbitrary"),
            vmem_limit_bytes=vmem_limit,
        ),
    )(v, at, dinv_row, b_comb)

    # Matches torch .squeeze() for N > 1 (N == 1 would give shape (1,) vs a scalar).
    return out[0, :n]


def _reference(x, edge_index, w_gcn, b_gcn, w_mlp, b_mlp):
    """Pure-JAX reference in the original (unfolded) op order."""
    n = x.shape[0]
    src, dst = edge_index[0], edge_index[1]
    loop = jnp.arange(n, dtype=edge_index.dtype)
    src = jnp.concatenate([src, loop])
    dst = jnp.concatenate([dst, loop])
    adj = jnp.zeros((n, n), jnp.float32).at[dst, src].add(1.0)
    deg = adj.sum(axis=1)
    dinv = jnp.where(deg > 0, 1.0 / jnp.sqrt(deg), 0.0)
    adj_norm = dinv[:, None] * adj * dinv[None, :]
    h = adj_norm @ (x @ w_gcn) + b_gcn[None, :]
    return jax.nn.sigmoid(h @ w_mlp + b_mlp).squeeze(-1)


if __name__ == "__main__":
    N, IN_DIM, HIDDEN = 300, 8, 32   # N not a multiple of the tile -> exercises padding

    key = jax.random.PRNGKey(0)
    k_x, k_wg, k_bg, k_wm, k_bm = jax.random.split(key, 5)

    x = jax.random.normal(k_x, (N, IN_DIM), jnp.float32)

    # Bidirectional ring graph, edge_index[0]=source, edge_index[1]=target.
    fwd_src = jnp.arange(N, dtype=jnp.int32)
    fwd_dst = (fwd_src + 1) % N
    edge_index = jnp.stack(
        [jnp.concatenate([fwd_src, fwd_dst]), jnp.concatenate([fwd_dst, fwd_src])]
    )

    w_gcn = jax.random.normal(k_wg, (IN_DIM, HIDDEN), jnp.float32) * 0.1
    b_gcn = jax.random.normal(k_bg, (HIDDEN,), jnp.float32) * 0.1
    w_mlp = jax.random.normal(k_wm, (HIDDEN, 1), jnp.float32) * 0.1
    b_mlp = jax.random.normal(k_bm, (1,), jnp.float32) * 0.1

    ref = _reference(x, edge_index, w_gcn, b_gcn, w_mlp, b_mlp)

    # Small explicit tiles -> 384-padded, 3x3 grid (multi-step pipeline + k accumulation).
    score = association_score(x, edge_index, w_gcn, b_gcn, w_mlp, b_mlp,
                              block_k=128, block_n=128)
    score = jax.block_until_ready(score)
    assert score.shape == (N,)
    assert jnp.allclose(score, ref, atol=1e-5, rtol=1e-5), \
        float(jnp.max(jnp.abs(score - ref)))

    # Default (large) tiles -> exercises tile clamping + the >=2-parallel-block heuristic.
    score2 = association_score(x, edge_index, w_gcn, b_gcn, w_mlp, b_mlp)
    score2 = jax.block_until_ready(score2)
    assert jnp.allclose(score2, ref, atol=1e-5, rtol=1e-5), \
        float(jnp.max(jnp.abs(score2 - ref)))

    print("KERNEL_OK")
</pallas_src>

<mosaic_0001>
module attributes {stable_mosaic.version = 11 : i64} {
  func.func @_assoc_score_kernel(%arg0: i32, %arg1: i32, %arg2: memref<2x384xbf16, #tpu.memory_space<vmem>>, %arg3: memref<128x128xi8, #tpu.memory_space<vmem>>, %arg4: memref<1x128xf32, #tpu.memory_space<vmem>>, %arg5: memref<1x1xf32, #tpu.memory_space<smem>>, %arg6: memref<1x128xf32, #tpu.memory_space<vmem>>, %arg7: memref<2x128xf32, #tpu.memory_space<vmem>>) attributes {dimension_semantics = [#tpu.dimension_semantics<parallel>, #tpu.dimension_semantics<arbitrary>], iteration_bounds = array<i64: 3, 3>, scalar_prefetch = 0 : i64, scratch_operands = 1 : i64, tpu.core_type = #tpu.core_type<tc>, window_params = [{pipeline_mode = #tpu.pipeline_mode<synchronous>, transform_indices = @transform_0, window_bounds = array<i64: 2, 384>}, {transform_indices = @transform_1, window_bounds = array<i64: 128, 128>}, {transform_indices = @transform_2, window_bounds = array<i64: 1, 128>}, {transform_indices = @transform_3, window_bounds = array<i64: 1, 1>}, {transform_indices = @transform_4, window_bounds = array<i64: 1, 128>}]} {
    %c0_i32 = arith.constant 0 : i32
    %0 = arith.cmpi eq, %arg1, %c0_i32 : i32
    %1 = arith.extui %0 : i1 to i32
    %c0_i32_0 = arith.constant 0 : i32
    %2 = arith.cmpi ne, %1, %c0_i32_0 : i32
    scf.if %2 {
      %cst_8 = arith.constant 0.000000e+00 : f32
      %16 = vector.broadcast %cst_8 : f32 to vector<2x128xf32>
      %c0_9 = arith.constant 0 : index
      %c0_10 = arith.constant 0 : index
      %17 = vector.load %arg7[%c0_9, %c0_10] : memref<2x128xf32, #tpu.memory_space<vmem>>, vector<2x128xf32>
      tpu.vector_store %arg7[%c0_9, %c0_10], %16 {strides = array<i32>} : memref<2x128xf32, #tpu.memory_space<vmem>>, vector<2x128xf32>,
    } else {
    }
    %c128_i32 = arith.constant 128 : i32
    %3 = arith.muli %arg1, %c128_i32 : i32
    %4 = tpu.assume_multiple %3, 128 : i32
    %c0 = arith.constant 0 : index
    %5 = arith.index_cast %4 : i32 to index
    %6 = vector.load %arg2[%c0, %5] : memref<2x384xbf16, #tpu.memory_space<vmem>>, vector<2x128xbf16>
    %c0_1 = arith.constant 0 : index
    %c0_2 = arith.constant 0 : index
    %7 = vector.load %arg3[%c0_1, %c0_2] : memref<128x128xi8, #tpu.memory_space<vmem>>, vector<128x128xi8>
    %8 = arith.sitofp %7 : vector<128x128xi8> to vector<128x128xbf16>
    %c0_3 = arith.constant 0 : index
    %c0_4 = arith.constant 0 : index
    %9 = vector.load %arg7[%c0_3, %c0_4] : memref<2x128xf32, #tpu.memory_space<vmem>>, vector<2x128xf32>
    %cst = arith.constant dense<0.000000e+00> : vector<2x128xf32>
    %10 = tpu.matmul %6, %8, %cst {dimension_numbers = #tpu.dot_dimension_numbers<[1], [0], [0], [1], [0, 0, 1, 1], [], []>} : vector<2x128xbf16>, vector<128x128xbf16>, vector<2x128xf32> -> vector<2x128xf32>
    %11 = arith.addf %9, %10 : vector<2x128xf32>
    %c0_5 = arith.constant 0 : index
    %c0_6 = arith.constant 0 : index
    %12 = vector.load %arg7[%c0_5, %c0_6] : memref<2x128xf32, #tpu.memory_space<vmem>>, vector<2x128xf32>
    tpu.vector_store %arg7[%c0_5, %c0_6], %11 {strides = array<i32>} : memref<2x128xf32, #tpu.memory_space<vmem>>, vector<2x128xf32>,
    %c2_i32 = arith.constant 2 : i32
    %13 = arith.cmpi eq, %arg1, %c2_i32 : i32
    %14 = arith.extui %13 : i1 to i32
    %c0_i32_7 = arith.constant 0 : i32
    %15 = arith.cmpi ne, %14, %c0_i32_7 : i32
    scf.if %15 {
      %c0_8 = arith.constant 0 : index
      %c0_9 = arith.constant 0 : index
      %16 = vector.load %arg7[%c0_8, %c0_9] : memref<2x128xf32, #tpu.memory_space<vmem>>, vector<1x128xf32>
      %c1 = arith.constant 1 : index
      %c0_10 = arith.constant 0 : index
      %17 = vector.load %arg7[%c1, %c0_10] : memref<2x128xf32, #tpu.memory_space<vmem>>, vector<1x128xf32>
      %18 = arith.addf %16, %17 : vector<1x128xf32>
      %c0_11 = arith.constant 0 : index
      %c0_12 = arith.constant 0 : index
      %19 = vector.load %arg4[%c0_11, %c0_12] : memref<1x128xf32, #tpu.memory_space<vmem>>, vector<1x128xf32>
      %20 = arith.mulf %18, %19 : vector<1x128xf32>
      %c0_13 = arith.constant 0 : index
      %c0_14 = arith.constant 0 : index
      %21 = memref.load %arg5[%c0_13, %c0_14] : memref<1x1xf32, #tpu.memory_space<smem>>
      %22 = vector.broadcast %21 : f32 to vector<1x128xf32>
      %23 = arith.addf %20, %22 : vector<1x128xf32>
      %24 = arith.negf %23 : vector<1x128xf32>
      %25 = math.exp %24 : vector<1x128xf32>
      %cst_15 = arith.constant 1.000000e+00 : f32
      %26 = vector.broadcast %cst_15 : f32 to vector<1x128xf32>
      %27 = arith.addf %26, %25 : vector<1x128xf32>
      %28 = arith.divf %26, %27 : vector<1x128xf32>
      %c0_16 = arith.constant 0 : index
      %c0_17 = arith.constant 0 : index
      %29 = vector.load %arg6[%c0_16, %c0_17] : memref<1x128xf32, #tpu.memory_space<vmem>>, vector<1x128xf32>
      tpu.vector_store %arg6[%c0_16, %c0_17], %28 {strides = array<i32>} : memref<1x128xf32, #tpu.memory_space<vmem>>, vector<1x128xf32>,
    } else {
    }
    return
  }
  func.func @transform_0(%arg0: i32, %arg1: i32) -> (i32, i32) {
    %c0_i32 = arith.constant 0 : i32
    %c0_i32_0 = arith.constant 0 : i32
    %c0_i32_1 = arith.constant 0 : i32
    return %c0_i32, %c0_i32_0 : i32, i32
  }
  func.func @transform_1(%arg0: i32, %arg1: i32) -> (i32, i32) {
    %c0_i32 = arith.constant 0 : i32
    return %arg1, %arg0 : i32, i32
  }
  func.func @transform_2(%arg0: i32, %arg1: i32) -> (i32, i32) {
    %c0_i32 = arith.constant 0 : i32
    %c0_i32_0 = arith.constant 0 : i32
    return %c0_i32, %arg0 : i32, i32
  }
  func.func @transform_3(%arg0: i32, %arg1: i32) -> (i32, i32) {
    %c0_i32 = arith.constant 0 : i32
    %c0_i32_0 = arith.constant 0 : i32
    %c0_i32_1 = arith.constant 0 : i32
    return %c0_i32, %c0_i32_0 : i32, i32
  }
  func.func @transform_4(%arg0: i32, %arg1: i32) -> (i32, i32) {
    %c0_i32 = arith.constant 0 : i32
    %c0_i32_0 = arith.constant 0 : i32
    return %c0_i32, %arg0 : i32, i32
  }
}

</mosaic_0001>

<llo_original>
// kernel: tpu_custom_call.1
$region0: #{tpu_custom_call.1}
  #allocation0 [shape = 'u32[]', space=smem, size = 0x4, offset = 0x4, fixed_abs, tag = 'smem constant byte address 0x4 - core index']
  #allocation1 [shape = 'u32[144,128]{1,0:T(1,128)}', space=vmem, size = 0x12000, scoped, tag = 'internal scratch']
  #allocation2 [shape = 'f32[2,128]{1,0:T(2,128)}', space=vmem, size = 0x400, scoped, tag = 'scratch operand']
  #allocation3 [shape = 'f32[1,1]{1,0:T(1,128)S(6)}', space=smem, size = 0x200, scoped, tag = 'scoped memory for tpu_custom_call.1']
  %s0 = inlined_call_operand.hbm [shape: bf16[2,384], index: 0, kind: input, shape index: {}]
  %s1 = inlined_call_operand.hbm [shape: s8[384,384], index: 1, kind: input, shape index: {}]
  %s2 = inlined_call_operand.vmem [shape: f32[1,384], index: 2, kind: input, shape index: {}]
  %s3 = inlined_call_operand.<no memory space> [shape: f32[1,1], index: 3, kind: input, shape index: {}]
  %s4 = inlined_call_operand.hbm [shape: f32[1,384], index: 4, kind: output, shape index: {}]
  %s5 = sld [smem:[#allocation0]]
  $region65: #{tpu_custom_call.1} parent=0
    _
  %s7 = ssub.s32 1, %s5
  %s8 = scalar_select 0, %s7, %s5
  %9 = sst [smem:[#allocation3]] %s3
  $region1: #{tpu_custom_call.1} parent=0
    #allocation4 [shape = 'u8[1536]{0}', space=vmem, size = 0x800, scoped, tag = 'input window, operand 0, single buffered']
    #allocation5 [shape = 's32[2]{0}', space=sflag, size = 0x8, scoped, tag = 'scoped memory for tpu_custom_call.1']
    #allocation6 [shape = 's32[2]{0}', space=sflag, size = 0x8, scoped, tag = 'scoped memory for tpu_custom_call.1']
    #allocation7 [shape = 'u8[32768]{0}', space=vmem, size = 0x8000, scoped, tag = 'input window, operand 1']
    #allocation8 [shape = 's32[2]{0}', space=sflag, size = 0x8, scoped, tag = 'scoped memory for tpu_custom_call.1']
    #allocation9 [shape = 'u8[1024]{0}', space=vmem, size = 0x400, scoped, tag = 'output window, operand 0']
    %10 = vsyncpa [#allocation5], 0
    %11 = vsyncpa [#allocation8], 0
    %s12 = scalar_lea.sflag [#allocation8], 1
    %13 = vsyncpa %s12, 0
    %14 = vsyncpa [#allocation6], 0
    %s15 = scalar_lea.sflag [#allocation6], 1
    %16 = vsyncpa %s15, 0
    loop: start=0, step=1, limit=11
    $region2: #{tpu_custom_call.1} parent=1 // loop_pre_header
      _
    $region3: #{tpu_custom_call.1} parent=1 // loop_header
      %s18 = sphi 0, %s22
      %p19 = scmp.ge.s32.totalorder %s18, 11
      %s25 = sphi 0, %s37
      %s26 = sphi 0, %s33
      %s27 = sphi 0, %s25
      %s28 = sphi 0, %s26
      %s29 = sphi 0, %s27
      %s30 = sphi 0, %s28
      %s38 = sphi 0, %s38
      %s40 = sphi 0, %s38
      %s41 = sphi 0, %s40
      %s55 = sphi 0, %s41
      %s63 = sphi 0, %s65
      %s66 = sphi 0, %s63
      %s67 = sphi 0, %s66
      %s83 = sphi 0, %s67
      %s89 = sphi 0, %s91
      %s92 = sphi 0, %s89
      %s93 = sphi 0, %s92
      %s109 = sphi 0, %s93
      %s113 = sphi 0, %s113
      %s115 = sphi 0, %s113
      %s116 = sphi 0, %s115
      %s130 = sphi 0, %s116
      %s136 = sphi 0, %s138
      %s139 = sphi 0, %s136
      %s140 = sphi 0, %s139
      %s156 = sphi 0, %s140
    $region4: #{tpu_custom_call.1} parent=1 // loop_header_branch
      %21 = sbr.rel (%p19) target = $region8
    $region5: #{tpu_custom_call.1} parent=1 // loop_body
      %s23 = ssub.s32 %s18, 1
      %s24 = ssub.s32 %s18, 2
      %s31 = sadd.s32 1, %s26
      %p32 = scmp.ge.s32.totalorder %s31, 3
      %s33 = scalar_select %p32, 0, %s31
      %s34 = sadd.s32 1, %s25
      %s35 = scalar_select %p32, %s34, %s25
      %p36 = scmp.ge.s32.totalorder %s35, 3
      %s37 = scalar_select %p36, 0, %s35
      %s39 = sadd.s32 %s38, 1
      %p42 = scmp.eq.s32.totalorder %s18, 8
      %p43 = scmp.ne.s32.totalorder %s38, %s40
      %p44 = scmp.eq.s32.totalorder %s18, 0
      %p45 = por %p43, %p44
      %p46 = scmp.ne.s32.totalorder %s38, %s40
      %p47 = scmp.eq.s32.totalorder %s23, 8
      %p48 = por %p46, %p47
      %p49 = scmp.ne.s32.totalorder %s40, %s41
      %p50 = scmp.eq.s32.totalorder %s23, 0
      %p51 = por %p49, %p50
      %p52 = scmp.ne.s32.totalorder %s40, %s41
      %p53 = scmp.eq.s32.totalorder %s24, 8
      %p54 = por %p52, %p53
      %p56 = scmp.ne.s32.totalorder %s41, %s55
      %p57 = scmp.eq.s32.totalorder %s24, 0
      %p58 = por %p56, %p57
      %s59 = ssub.s32 %s26, %s33
      %s60 = ssub.s32 %s25, %s37
      %s61 = sor.u32 %s59, %s60
      %p62 = scmp.eq.s32.totalorder %s61, 0
      %s64 = sadd.s32 %s63, 1
      %s65 = scalar_select %p62, %s63, %s64
      %p68 = pneg %p62
      %p69 = scmp.eq.s32.totalorder %s18, 8
      %p70 = por %p68, %p69
      %p71 = scmp.ne.s32.totalorder %s63, %s66
      %p72 = scmp.eq.s32.totalorder %s18, 0
      %p73 = por %p71, %p72
      %p74 = scmp.ne.s32.totalorder %s63, %s66
      %p75 = scmp.eq.s32.totalorder %s23, 8
      %p76 = por %p74, %p75
      %p77 = scmp.ne.s32.totalorder %s66, %s67
      %p78 = scmp.eq.s32.totalorder %s23, 0
      %p79 = por %p77, %p78
      %p80 = scmp.ne.s32.totalorder %s66, %s67
      %p81 = scmp.eq.s32.totalorder %s24, 8
      %p82 = por %p80, %p81
      %p84 = scmp.ne.s32.totalorder %s67, %s83
      %p85 = scmp.eq.s32.totalorder %s24, 0
      %p86 = por %p84, %p85
      %s87 = ssub.s32 %s25, %s37
      %p88 = scmp.eq.s32.totalorder %s87, 0
      %s90 = sadd.s32 %s89, 1
      %s91 = scalar_select %p88, %s89, %s90
      %p94 = pneg %p88
      %p95 = scmp.eq.s32.totalorder %s18, 8
      %p96 = por %p94, %p95
      %p97 = scmp.ne.s32.totalorder %s89, %s92
      %p98 = scmp.eq.s32.totalorder %s18, 0
      %p99 = por %p97, %p98
      %p100 = scmp.ne.s32.totalorder %s89, %s92
      %p101 = scmp.eq.s32.totalorder %s23, 8
      %p102 = por %p100, %p101
      %p103 = scmp.ne.s32.totalorder %s92, %s93
      %p104 = scmp.eq.s32.totalorder %s23, 0
      %p105 = por %p103, %p104
      %p106 = scmp.ne.s32.totalorder %s92, %s93
      %p107 = scmp.eq.s32.totalorder %s24, 8
      %p108 = por %p106, %p107
      %p110 = scmp.ne.s32.totalorder %s93, %s109
      %p111 = scmp.eq.s32.totalorder %s24, 0
      %p112 = por %p110, %p111
      %s114 = sadd.s32 %s113, 1
      %p117 = scmp.eq.s32.totalorder %s18, 8
      %p118 = scmp.ne.s32.totalorder %s113, %s115
      %p119 = scmp.eq.s32.totalorder %s18, 0
      %p120 = por %p118, %p119
      %p121 = scmp.ne.s32.totalorder %s113, %s115
      %p122 = scmp.eq.s32.totalorder %s23, 8
      %p123 = por %p121, %p122
      %p124 = scmp.ne.s32.totalorder %s115, %s116
      %p125 = scmp.eq.s32.totalorder %s23, 0
      %p126 = por %p124, %p125
      %p127 = scmp.ne.s32.totalorder %s115, %s116
      %p128 = scmp.eq.s32.totalorder %s24, 8
      %p129 = por %p127, %p128
      %p131 = scmp.ne.s32.totalorder %s116, %s130
      %p132 = scmp.eq.s32.totalorder %s24, 0
      %p133 = por %p131, %p132
      %s134 = ssub.s32 %s25, %s37
      %p135 = scmp.eq.s32.totalorder %s134, 0
      %s137 = sadd.s32 %s136, 1
      %s138 = scalar_select %p135, %s136, %s137
      %p141 = pneg %p135
      %p142 = scmp.eq.s32.totalorder %s18, 8
      %p143 = por %p141, %p142
      %p144 = scmp.ne.s32.totalorder %s136, %s139
      %p145 = scmp.eq.s32.totalorder %s18, 0
      %p146 = por %p144, %p145
      %p147 = scmp.ne.s32.totalorder %s136, %s139
      %p148 = scmp.eq.s32.totalorder %s23, 8
      %p149 = por %p147, %p148
      %p150 = scmp.ne.s32.totalorder %s139, %s140
      %p151 = scmp.eq.s32.totalorder %s23, 0
      %p152 = por %p150, %p151
      %p153 = scmp.ne.s32.totalorder %s139, %s140
      %p154 = scmp.eq.s32.totalorder %s24, 8
      %p155 = por %p153, %p154
      %p157 = scmp.ne.s32.totalorder %s140, %s156
      %p158 = scmp.eq.s32.totalorder %s24, 0
      %p159 = por %p157, %p158
      %p160 = scmp.le.s32.totalorder 1, %s18
      %p161 = scmp.lt.s32.totalorder %s18, 10
      %p162 = pnand %p160, %p161
      %p163 = pneg %p162
      // Predicated region
      $region9: #{tpu_custom_call.1} parent=5 // pred_check
        _
      $region10: #{tpu_custom_call.1} parent=5 // pred_check_branch
        %165 = sbr.rel (%p162) target = $region12
      $region11: #{tpu_custom_call.1} parent=5 // pred_region
        %s166 = ssub.s32 %s18, 1
        // Predicated region
        $region13: #{tpu_custom_call.1} parent=11 // pred_check
          %p167 = pneg %p51
        $region14: #{tpu_custom_call.1} parent=11 // pred_check_branch
          %169 = sbr.rel (%p167) target = $region16
        $region15: #{tpu_custom_call.1} parent=11 // pred_region
          %s171 = ssub.s32 48, 48
          %172 = vsyncadd [#allocation5], %s171
          %s174 = sshll.u32 [#allocation4], 4
          %s175 = int_to_ptr.vmem [resolvable:$true] %s174
          %177 = dma.hbm_to_vmem [thread:$0]  %s0, 48, %s175, [#allocation5]
        $region16: #{tpu_custom_call.1} parent=11 // pred_fallthru
          _
        // Predicated region
        $region17: #{tpu_custom_call.1} parent=11 // pred_check
          %p178 = pneg %p126
        $region18: #{tpu_custom_call.1} parent=11 // pred_check_branch
          %180 = sbr.rel (%p178) target = $region20
        $region19: #{tpu_custom_call.1} parent=11 // pred_region
          _
        $region20: #{tpu_custom_call.1} parent=11 // pred_fallthru
          _
      $region12: #{tpu_custom_call.1} parent=5 // pred_fallthru
        _
      %p181 = scmp.lt.s32.totalorder %s18, 9
      // Predicated region
      $region21: #{tpu_custom_call.1} parent=5 // pred_check
        %p182 = pneg %p181
      $region22: #{tpu_custom_call.1} parent=5 // pred_check_branch
        %184 = sbr.rel (%p182) target = $region24
      $region23: #{tpu_custom_call.1} parent=5 // pred_region
        // Predicated region
        $region25: #{tpu_custom_call.1} parent=23 // pred_check
          %p185 = pneg %p73
        $region26: #{tpu_custom_call.1} parent=23 // pred_check_branch
          %187 = sbr.rel (%p185) target = $region28
        $region27: #{tpu_custom_call.1} parent=23 // pred_region
          %s188 = sand.u32 %s63, 1
          %s189 = scalar_lea.sflag [#allocation8], %s188
          %s190 = sand.u32 %s63, 1
          %s191 = smul.addr %s190, 32
          %s192 = scalar_lea.vmem [#allocation7], %s191
          %s193 = smul.u32 4, %s26
          %s195 = ssub.s32 512, 512
          %196 = vsyncadd %s189, %s195
          %s197 = smul.addr %s193, 3
          %s198 = sadd.s32 %s25, %s197
          %s199 = smul.addr %s198, 128
          %s200 = scalar_lea.hbm %s1, %s199
          %s201 = sshll.u32 %s192, 4
          %s202 = int_to_ptr.vmem [resolvable:$true] %s201
          %207 = dma.hbm_to_vmem [thread:$0]  %s200, 512, %s202, %s189, 384, 128, 8
        $region28: #{tpu_custom_call.1} parent=23 // pred_fallthru
          _
        // Predicated region
        $region29: #{tpu_custom_call.1} parent=23 // pred_check
          %p208 = pneg %p99
        $region30: #{tpu_custom_call.1} parent=23 // pred_check_branch
          %210 = sbr.rel (%p208) target = $region32
        $region31: #{tpu_custom_call.1} parent=23 // pred_region
          %p211 = scmp.lt.s32.totalorder %s25, 2
          %s212 = scalar_select %p211, %s25, 2
          %s213 = scalar_lea.vmem %s2, %s212
        $region32: #{tpu_custom_call.1} parent=23 // pred_fallthru
          _
      $region24: #{tpu_custom_call.1} parent=5 // pred_fallthru
        _
      %p214 = scmp.le.s32.totalorder 1, %s18
      %p215 = scmp.lt.s32.totalorder %s18, 10
      %p216 = pnand %p214, %p215
      %p217 = pneg %p216
      // Predicated region
      $region33: #{tpu_custom_call.1} parent=5 // pred_check
        _
      $region34: #{tpu_custom_call.1} parent=5 // pred_check_branch
        %219 = sbr.rel (%p216) target = $region36
      $region35: #{tpu_custom_call.1} parent=5 // pred_region
        %s220 = ssub.s32 %s18, 1
        // Predicated region
        $region37: #{tpu_custom_call.1} parent=35 // pred_check
          %p221 = pneg %p51
        $region38: #{tpu_custom_call.1} parent=35 // pred_check_branch
          %223 = sbr.rel (%p221) target = $region40
        $region39: #{tpu_custom_call.1} parent=35 // pred_region
          %224 = dma.done [#allocation5], 48
        $region40: #{tpu_custom_call.1} parent=35 // pred_fallthru
          _
        %s225 = sand.u32 %s66, 1
        %s226 = scalar_lea.sflag [#allocation8], %s225
        %s227 = sand.u32 %s66, 1
        %s228 = smul.addr %s227, 32
        %s229 = scalar_lea.vmem [#allocation7], %s228
        // Predicated region
        $region41: #{tpu_custom_call.1} parent=35 // pred_check
          %p230 = pneg %p79
        $region42: #{tpu_custom_call.1} parent=35 // pred_check_branch
          %232 = sbr.rel (%p230) target = $region44
        $region43: #{tpu_custom_call.1} parent=35 // pred_region
          %233 = dma.done %s226, 512
        $region44: #{tpu_custom_call.1} parent=35 // pred_fallthru
          _
        %p234 = pneg %p51
        %p235 = pneg %p48
        %s236 = sand.u32 %s66, 1
        %s237 = scalar_lea.sflag [#allocation8], %s236
        %s238 = sand.u32 %s66, 1
        %s239 = smul.addr %s238, 32
        %s240 = scalar_lea.vmem [#allocation7], %s239
        %p241 = pneg %p79
        %p242 = pneg %p76
        %p243 = scmp.lt.s32.totalorder %s27, 2
        %s244 = scalar_select %p243, %s27, 2
        %s245 = scalar_lea.vmem %s2, %s244
        %p246 = pneg %p105
        %p247 = pneg %p102
        %p248 = pneg %p126
        %p249 = pneg %p123
        %p250 = pneg %p152
        %p251 = pneg %p149
        %s252 = sand.u32 %s139, 1
        %s253 = scalar_lea.sflag [#allocation6], %s252
        %s254 = sand.u32 %s139, 1
        %s255 = scalar_lea.vmem [#allocation9], %s254
        %s256 = smul.u32 4, %s28
        %p257 = scmp.lt.s32.totalorder %s27, 2
        %s258 = scalar_select %p257, %s27, 2
        %s259 = scalar_lea.vmem %s2, %s258
        %p261 = scmp.eq.s32.totalorder %s28, 0
        // Predicated region
        $region45: #{tpu_custom_call.1} parent=35 // pred_check
          %p262 = pneg %p261
        $region46: #{tpu_custom_call.1} parent=35 // pred_check_branch
          %264 = sbr.rel (%p262) target = $region48
        $region47: #{tpu_custom_call.1} parent=35 // pred_region
          %265 = vst [vmem:[#allocation2] sm:$0x3] 0.0
        $region48: #{tpu_custom_call.1} parent=35 // pred_fallthru
          _
        %s266 = smul.u32 %s28, 128
        %s267 = sshra.s32 %s266, 7
        %s268 = sand.u32 %s266, 127
        %s269 = scalar_lea.vmem [#allocation4], %s267
        %v270 = vld [vmem:[%s269] sm:$0x1]
        %v271 = vld [vmem:[%s229] sm:$0xff]
        %v272 = vld [vmem:[%s229 + $0x8] sm:$0xff]
        %v273 = vld [vmem:[%s229 + $0x10] sm:$0xff]
        %v274 = vld [vmem:[%s229 + $0x18] sm:$0xff]
        %v275 = vunpack.c.l.s8.bf16 %v271
        %v276 = vunpack.c.h.s8.bf16 %v271
        %v277 = vunpack.c.l.s8.bf16 %v272
        %v278 = vunpack.c.h.s8.bf16 %v272
        %v279 = vunpack.c.l.s8.bf16 %v273
        %v280 = vunpack.c.h.s8.bf16 %v273
        %v281 = vunpack.c.l.s8.bf16 %v274
        %v282 = vunpack.c.h.s8.bf16 %v274
        %v283 = vld [vmem:[#allocation2] sm:$0x3]
        %284 = vmatprep.subr.bf16.mxu0 0
        %285 = vmatpush1.bf16.msra.mxu0 %v282
        %286 = vmatprep.subr.bf16.mxu0 0
        %287 = vmatpush1.bf16.msra.mxu0 %v281
        %288 = vmatprep.subr.bf16.mxu0 0
        %289 = vmatpush1.bf16.msra.mxu0 %v280
        %290 = vmatprep.subr.bf16.mxu0 0
        %291 = vmatpush1.bf16.msra.mxu0 %v279
        %292 = vmatprep.subr.bf16.mxu0 0
        %293 = vmatpush1.bf16.msra.mxu0 %v278
        %294 = vmatprep.subr.bf16.mxu0 0
        %295 = vmatpush1.bf16.msra.mxu0 %v277
        %296 = vmatprep.subr.bf16.mxu0 0
        %297 = vmatpush1.bf16.msra.mxu0 %v276
        %298 = vmatprep.subr.bf16.mxu0 0
        %299 = vmatpush1.bf16.msra.mxu0 %v275
        %300 = vmatprep.subr.bf16.mxu0 0
        %301 = vmatpush2.bf16.msra.mxu0 0
        %302 = vmatprep.subr.bf16.mxu0 0
        %303 = vmatpush2.bf16.msra.mxu0 0
        %304 = vmatprep.subr.bf16.mxu0 0
        %305 = vmatpush2.bf16.msra.mxu0 0
        %306 = vmatprep.subr.bf16.mxu0 0
        %307 = vmatpush2.bf16.msra.mxu0 0
        %308 = vmatprep.subr.bf16.mxu0 0
        %309 = vmatpush2.bf16.msra.mxu0 0
        %310 = vmatprep.subr.bf16.mxu0 0
        %311 = vmatpush2.bf16.msra.mxu0 0
        %312 = vmatprep.subr.bf16.mxu0 0
        %313 = vmatpush2.bf16.msra.mxu0 0
        %314 = vmatprep.subr.bf16.mxu0 0
        %315 = vmatpush2.bf16.msra.mxu0 0
        %316 = vmatprep.mubr.bf16.mxu0 0
        %317 = vmatmul.mubr.bf16.gmra.mxu0 %v270
        %v318 = vpop.f32.mrf.mxu0
        %v319 = vadd.f32 0.0, %v318
        %v320 = vpop.f32.mrf.mxu0
        %v321 = vpop.f32.mrf.mxu0
        %v322 = vpop.f32.mrf.mxu0
        %323 = vdwg.mxu0
        %v324 = vadd.f32 %v283, %v319
        %325 = vst [vmem:[#allocation2] sm:$0x3] %v324
        %p326 = scmp.eq.s32.totalorder %s28, 2
        // Predicated region
        $region49: #{tpu_custom_call.1} parent=35 // pred_check
          %p327 = pneg %p326
        $region50: #{tpu_custom_call.1} parent=35 // pred_check_branch
          %329 = sbr.rel (%p327) target = $region52
        $region51: #{tpu_custom_call.1} parent=35 // pred_region
          %v330 = vld [vmem:[#allocation2] sm:$0x1]
          %v331 = vld [vmem:[#allocation2 + $0x1] sm:$0x1]
          %v332 = vadd.f32 %v330, %v331
          %v333 = vld [vmem:[%s259] sm:$0x1]
          %v334 = vmul.f32 %v332, %v333
          %s335 = sld [smem:[#allocation3]]
          %v336 = vstv %s335
          %v337 = vadd.f32 %v334, %v336
          %v338 = vxor.u32 %v337, 2147483648
          %v339 = vmul.f32 %v338, 1.442695
          %v340 = vpow.pop %v339
          %v341 = vadd.f32 %v340, 1.0
          %v342 = vrcp.pop %v341
          %v343 = vmul.f32 1.0, %v342
          %344 = vst [vmem:[%s255] sm:$0x1] %v343
        $region52: #{tpu_custom_call.1} parent=35 // pred_fallthru
          _
        %s345 = sand.u32 %s139, 1
        %s346 = scalar_lea.sflag [#allocation6], %s345
        %s347 = sand.u32 %s139, 1
        %s348 = scalar_lea.vmem [#allocation9], %s347
        // Predicated region
        $region53: #{tpu_custom_call.1} parent=35 // pred_check
          %p349 = pneg %p149
        $region54: #{tpu_custom_call.1} parent=35 // pred_check_branch
          %351 = sbr.rel (%p349) target = $region56
        $region55: #{tpu_custom_call.1} parent=35 // pred_region
          %s353 = ssub.s32 16, 16
          %354 = vsyncadd %s346, %s353
          %s355 = smul.addr %s27, 16
          %s356 = scalar_lea.hbm %s4, %s355
          %s358 = sshll.u32 %s348, 4
          %s359 = int_to_ptr.vmem [resolvable:$true] %s358
          %361 = dma.vmem_to_hbm [thread:$0]  %s359, 16, %s356, %s346
        $region56: #{tpu_custom_call.1} parent=35 // pred_fallthru
          _
      $region36: #{tpu_custom_call.1} parent=5 // pred_fallthru
        _
      %p362 = scmp.le.s32.totalorder 2, %s18
      // Predicated region
      $region57: #{tpu_custom_call.1} parent=5 // pred_check
        %p363 = pneg %p362
      $region58: #{tpu_custom_call.1} parent=5 // pred_check_branch
        %365 = sbr.rel (%p363) target = $region60
      $region59: #{tpu_custom_call.1} parent=5 // pred_region
        %s366 = ssub.s32 %s18, 2
        // Predicated region
        $region61: #{tpu_custom_call.1} parent=59 // pred_check
          %p367 = pneg %p155
        $region62: #{tpu_custom_call.1} parent=59 // pred_check_branch
          %369 = sbr.rel (%p367) target = $region64
        $region63: #{tpu_custom_call.1} parent=59 // pred_region
          %s370 = sand.u32 %s140, 1
          %s371 = scalar_lea.sflag [#allocation6], %s370
          %s372 = sand.u32 %s140, 1
          %s373 = scalar_lea.vmem [#allocation9], %s372
          %374 = dma.done %s371, 16
        $region64: #{tpu_custom_call.1} parent=59 // pred_fallthru
          _
      $region60: #{tpu_custom_call.1} parent=5 // pred_fallthru
        _
    $region6: #{tpu_custom_call.1} parent=1 // loop_footer
      %s22 = sadd.s32 1, %s18
    $region7: #{tpu_custom_call.1} parent=1 // loop_footer_branch
      %17 = sbr.rel target = $region3
    $region8: #{tpu_custom_call.1} parent=1 // loop_exit
      _
    %375 = vsyncpa [#allocation5], 1
    %s376 = scalar_lea.sflag [#allocation5], 1
    %377 = vsyncpa %s376, 1
    %378 = vsyncpa [#allocation8], 1
    %s379 = scalar_lea.sflag [#allocation8], 1
    %380 = vsyncpa %s379, 1
    %381 = vsyncpa [#allocation6], 1
    %s382 = scalar_lea.sflag [#allocation6], 1
    %383 = vsyncpa %s382, 1

</llo_original>
